<compile_context>
chip_gen: v7x
topology: tpu7x:2x2x1
jax: 0.10.0
libtpu: 0.0.40
codegen_flags: <defaults>
</compile_context>

<pallas_src>
import jax
import jax.numpy as jnp
from jax.experimental import pallas as pl
from jax.experimental.pallas import tpu as pltpu

HIDDEN = 100          # logical hidden / output width of fc1 & fc2
HIDDEN_PAD = 128      # lane-dense padded width

_VMEM_BUDGET = 40 * 1024 * 1024   # target pipeline footprint (fits v7x 64 MiB)


def _round_up(x, m):
    return ((x + m - 1) // m) * m


# ----------------------------- kernel body ----------------------------------
def _mlp_kernel(x_ref, w1_ref, b1_ref, w2_ref, b2_ref, o_ref):
    # Cast x -> bf16 *inside* the kernel (no separate XLA pass over x in HBM).
    x = x_ref[...].astype(jnp.bfloat16)
    # fc1: (TB, D)bf16 @ (D, 128)bf16 -> f32 accumulate on MXU
    h = jnp.dot(x, w1_ref[...], preferred_element_type=jnp.float32)
    # bias add + tanh in f32 (EUP); padded lanes stay exactly 0 (tanh(0)=0)
    h = jnp.tanh(h + b1_ref[...])
    # fc2: cast activations to bf16 for the MXU, accumulate in f32
    y = jnp.dot(h.astype(w2_ref.dtype), w2_ref[...],
                preferred_element_type=jnp.float32)
    o_ref[...] = (y + b2_ref[...]).astype(o_ref.dtype)


# ------------------------- one-time parameter prep ---------------------------
def prepare_params(w1, b1, w2, b2):
    """Pad 100 -> 128 with exact zeros and store weights in bf16.

    Call ONCE (e.g. at model load), not per forward call.
    w1: (D, 100), b1: (1, 100), w2: (100, 100), b2: (1, 100)  -- torch weights
    transposed to (in, out) layout.
    """
    D = w1.shape[0]
    w1p = jnp.zeros((D, HIDDEN_PAD), jnp.bfloat16)
    w1p = w1p.at[:, :HIDDEN].set(w1.astype(jnp.bfloat16))
    b1p = jnp.zeros((1, HIDDEN_PAD), jnp.float32).at[:, :HIDDEN].set(b1)
    w2p = jnp.zeros((HIDDEN_PAD, HIDDEN_PAD), jnp.bfloat16)
    w2p = w2p.at[:HIDDEN, :HIDDEN].set(w2.astype(jnp.bfloat16))
    b2p = jnp.zeros((1, HIDDEN_PAD), jnp.float32).at[:, :HIDDEN].set(b2)
    return w1p, b1p, w2p, b2p


# --------------------------- tiling heuristics --------------------------------
def _vmem_footprint_bytes(block_b, d):
    """Conservative per-step VMEM footprint of the pipeline."""
    x_in = 2 * block_b * d * 4                    # f32 x tile, double-buffered
    y_out = 2 * block_b * HIDDEN_PAD * 4          # f32 out tile, double-buffered
    w1 = 2 * d * HIDDEN_PAD * 2                   # bf16 w1 (assume 2 copies)
    w2 = 2 * HIDDEN_PAD * HIDDEN_PAD * 2          # bf16 w2 (assume 2 copies)
    biases = 2 * 2 * HIDDEN_PAD * 4
    # in-kernel intermediates: bf16 copy of x tile + f32 h / y tiles
    scratch = block_b * d * 2 + 2 * block_b * HIDDEN_PAD * 4
    return x_in + y_out + w1 + w2 + biases + scratch


def _default_block_b(B, d):
    # ~8 grid steps so DMA double-buffering + v7x megacore engage; 512 rows is
    # already ~85% of HBM roofline, so no need to go bigger.
    b = min(512, _round_up(pl.cdiv(B, 8), 16))
    b = max(8, min(b, _round_up(B, 8)))           # don't exceed (rounded) batch
    # D-aware cap against the VMEM budget (matters for very wide D on v7x).
    while b > 16 and _vmem_footprint_bytes(b, d) > _VMEM_BUDGET:
        b = max(16, _round_up(b // 2, 8))
    return b


# ------------------------------- forward -------------------------------------
def nn_classifier_forward(x, params, *, block_b=None, out_dtype=jnp.float32,
                          return_padded=False):
    """Compute fc2(tanh(fc1(x))) with a single batch-tiled Pallas kernel.

    x      : (B, D) float32 (or bf16)
    params : output of prepare_params(w1, b1, w2, b2)
    returns (B, 100) by default, or the lane-dense (B, 128) slab if
    return_padded=True (padded columns are exactly zero).
    """
    w1p, b1p, w2p, b2p = params
    B, D = x.shape
    assert w1p.shape == (D, HIDDEN_PAD), "params must come from prepare_params"

    if block_b is None:
        block_b = _default_block_b(B, D)

    grid = (pl.cdiv(B, block_b),)   # ragged last block handled by Pallas masking

    vmem_limit = int(min(64 * 1024 * 1024,
                         max(16 * 1024 * 1024,
                             _vmem_footprint_bytes(block_b, D) + (8 << 20))))

    const2d = lambda i: (0, 0)   # weights/biases: VMEM-resident, never re-fetched

    out = pl.pallas_call(
        _mlp_kernel,
        out_shape=jax.ShapeDtypeStruct((B, HIDDEN_PAD), out_dtype),
        grid=grid,
        in_specs=[
            pl.BlockSpec((block_b, D), lambda i: (i, 0)),       # x tile (f32)
            pl.BlockSpec((D, HIDDEN_PAD), const2d),             # w1 (bf16)
            pl.BlockSpec((1, HIDDEN_PAD), const2d),             # b1 (f32)
            pl.BlockSpec((HIDDEN_PAD, HIDDEN_PAD), const2d),    # w2 (bf16)
            pl.BlockSpec((1, HIDDEN_PAD), const2d),             # b2 (f32)
        ],
        out_specs=pl.BlockSpec((block_b, HIDDEN_PAD), lambda i: (i, 0)),
        compiler_params=pltpu.CompilerParams(
            dimension_semantics=("parallel",),   # v7x: shard batch over 2 TCs
            vmem_limit_bytes=vmem_limit,         # footprint-derived, not fixed
        ),
    )(x, w1p, b1p, w2p, b2p)

    if return_padded:
        return out          # (B, 128); cols [100:128] are exact zeros
    return out[:, :HIDDEN]  # logical (B, 100)


# ------------------------------ init & reference -----------------------------
def init_params(key, input_size, hidden=HIDDEN, out_unused=2):
    """Deterministic init mimicking torch.nn.Linear default U(-k, k), k=1/sqrt(fan_in)."""
    k1, k2, k3, k4, k5, k6 = jax.random.split(key, 6)

    def uniform(k, shape, fan_in):
        bound = 1.0 / jnp.sqrt(fan_in)
        return jax.random.uniform(k, shape, jnp.float32, -bound, bound)

    # stored as (in, out) = torch weight transposed
    w1 = uniform(k1, (input_size, hidden), input_size)
    b1 = uniform(k2, (1, hidden), input_size)
    w2 = uniform(k3, (hidden, hidden), hidden)
    b2 = uniform(k4, (1, hidden), hidden)
    # fc3 params exist in the module but are unused by forward()
    w3 = uniform(k5, (hidden, out_unused), hidden)
    b3 = uniform(k6, (1, out_unused), hidden)
    return w1, b1, w2, b2, w3, b3


def _reference_bf16_pipeline(x, w1, b1, w2, b2):
    """Plain-XLA reference with the same dtype pipeline the kernel uses."""
    xq = x.astype(jnp.bfloat16)
    w1q = w1.astype(jnp.bfloat16)
    w2q = w2.astype(jnp.bfloat16)
    h = jnp.dot(xq, w1q, preferred_element_type=jnp.float32) + b1
    h = jnp.tanh(h)
    y = jnp.dot(h.astype(jnp.bfloat16), w2q,
                preferred_element_type=jnp.float32) + b2
    return y


if __name__ == "__main__":
    key = jax.random.PRNGKey(0)
    batch, input_size = 2, 32

    pkey, xkey = jax.random.split(key)
    w1, b1, w2, b2, _w3, _b3 = init_params(pkey, input_size)
    params = prepare_params(w1, b1, w2, b2)     # one-time prep
    x = jax.random.normal(xkey, (batch, input_size), jnp.float32)

    out = nn_classifier_forward(x, params)
    out = jax.block_until_ready(out)
    assert out.shape == (batch, HIDDEN)

    # Exact-pipeline reference (same bf16 storage / f32 accumulation).
    ref_q = _reference_bf16_pipeline(x, w1, b1, w2, b2)
    assert jnp.allclose(out, ref_q, atol=1e-4, rtol=1e-4)

    # Loose sanity check against pure-f32 math (bf16 storage rounding only).
    ref_f32 = jnp.tanh(x @ w1 + b1) @ w2 + b2
    assert jnp.allclose(out, ref_f32, atol=1e-1, rtol=1e-1)

    # Padded output path: extra 28 columns must be exact zeros.
    out_pad = jax.block_until_ready(nn_classifier_forward(x, params, return_padded=True))
    assert out_pad.shape == (batch, HIDDEN_PAD)
    assert jnp.all(out_pad[:, HIDDEN:] == 0.0)

    print("KERNEL_OK")
</pallas_src>

<mosaic_0001>
module attributes {stable_mosaic.version = 11 : i64} {
  func.func @_mlp_kernel(%arg0: i32, %arg1: memref<8x32xf32, #tpu.memory_space<vmem>>, %arg2: memref<32x128xbf16, #tpu.memory_space<vmem>>, %arg3: memref<1x128xf32, #tpu.memory_space<vmem>>, %arg4: memref<128x128xbf16, #tpu.memory_space<vmem>>, %arg5: memref<1x128xf32, #tpu.memory_space<vmem>>, %arg6: memref<8x128xf32, #tpu.memory_space<vmem>>) attributes {dimension_semantics = [#tpu.dimension_semantics<parallel>], iteration_bounds = array<i64: 1>, scalar_prefetch = 0 : i64, scratch_operands = 0 : i64, tpu.core_type = #tpu.core_type<tc>, window_params = [{transform_indices = @transform_0, window_bounds = array<i64: 8, 32>}, {pipeline_mode = #tpu.pipeline_mode<synchronous>, transform_indices = @transform_1, window_bounds = array<i64: 32, 128>}, {pipeline_mode = #tpu.pipeline_mode<synchronous>, transform_indices = @transform_2, window_bounds = array<i64: 1, 128>}, {pipeline_mode = #tpu.pipeline_mode<synchronous>, transform_indices = @transform_3, window_bounds = array<i64: 128, 128>}, {pipeline_mode = #tpu.pipeline_mode<synchronous>, transform_indices = @transform_4, window_bounds = array<i64: 1, 128>}, {transform_indices = @transform_5, window_bounds = array<i64: 8, 128>}]} {
    %c0 = arith.constant 0 : index
    %c0_0 = arith.constant 0 : index
    %0 = vector.load %arg1[%c0, %c0_0] : memref<8x32xf32, #tpu.memory_space<vmem>>, vector<8x32xf32>
    %1 = arith.truncf %0 : vector<8x32xf32> to vector<8x32xbf16>
    %c0_1 = arith.constant 0 : index
    %c0_2 = arith.constant 0 : index
    %2 = vector.load %arg2[%c0_1, %c0_2] : memref<32x128xbf16, #tpu.memory_space<vmem>>, vector<32x128xbf16>
    %cst = arith.constant dense<0.000000e+00> : vector<8x128xf32>
    %3 = tpu.matmul %1, %2, %cst {dimension_numbers = #tpu.dot_dimension_numbers<[1], [0], [0], [1], [0, 0, 1, 1], [], []>} : vector<8x32xbf16>, vector<32x128xbf16>, vector<8x128xf32> -> vector<8x128xf32>
    %c0_3 = arith.constant 0 : index
    %c0_4 = arith.constant 0 : index
    %4 = vector.load %arg3[%c0_3, %c0_4] : memref<1x128xf32, #tpu.memory_space<vmem>>, vector<1x128xf32>
    %5 = vector.broadcast %4 : vector<1x128xf32> to vector<8x128xf32>
    %6 = arith.addf %3, %5 : vector<8x128xf32>
    %7 = math.tanh %6 : vector<8x128xf32>
    %8 = arith.truncf %7 : vector<8x128xf32> to vector<8x128xbf16>
    %c0_5 = arith.constant 0 : index
    %c0_6 = arith.constant 0 : index
    %9 = vector.load %arg4[%c0_5, %c0_6] : memref<128x128xbf16, #tpu.memory_space<vmem>>, vector<128x128xbf16>
    %cst_7 = arith.constant dense<0.000000e+00> : vector<8x128xf32>
    %10 = tpu.matmul %8, %9, %cst_7 {dimension_numbers = #tpu.dot_dimension_numbers<[1], [0], [0], [1], [0, 0, 1, 1], [], []>} : vector<8x128xbf16>, vector<128x128xbf16>, vector<8x128xf32> -> vector<8x128xf32>
    %c0_8 = arith.constant 0 : index
    %c0_9 = arith.constant 0 : index
    %11 = vector.load %arg5[%c0_8, %c0_9] : memref<1x128xf32, #tpu.memory_space<vmem>>, vector<1x128xf32>
    %12 = vector.broadcast %11 : vector<1x128xf32> to vector<8x128xf32>
    %13 = arith.addf %10, %12 : vector<8x128xf32>
    %c0_10 = arith.constant 0 : index
    %c0_11 = arith.constant 0 : index
    %14 = vector.load %arg6[%c0_10, %c0_11] : memref<8x128xf32, #tpu.memory_space<vmem>>, vector<8x128xf32>
    tpu.vector_store %arg6[%c0_10, %c0_11], %13 {strides = array<i32>} : memref<8x128xf32, #tpu.memory_space<vmem>>, vector<8x128xf32>,
    return
  }
  func.func @transform_0(%arg0: i32) -> (i32, i32) {
    %c0_i32 = arith.constant 0 : i32
    %c0_i32_0 = arith.constant 0 : i32
    return %arg0, %c0_i32 : i32, i32
  }
  func.func @transform_1(%arg0: i32) -> (i32, i32) {
    %c0_i32 = arith.constant 0 : i32
    %c0_i32_0 = arith.constant 0 : i32
    %c0_i32_1 = arith.constant 0 : i32
    return %c0_i32, %c0_i32_0 : i32, i32
  }
  func.func @transform_2(%arg0: i32) -> (i32, i32) {
    %c0_i32 = arith.constant 0 : i32
    %c0_i32_0 = arith.constant 0 : i32
    %c0_i32_1 = arith.constant 0 : i32
    return %c0_i32, %c0_i32_0 : i32, i32
  }
  func.func @transform_3(%arg0: i32) -> (i32, i32) {
    %c0_i32 = arith.constant 0 : i32
    %c0_i32_0 = arith.constant 0 : i32
    %c0_i32_1 = arith.constant 0 : i32
    return %c0_i32, %c0_i32_0 : i32, i32
  }
  func.func @transform_4(%arg0: i32) -> (i32, i32) {
    %c0_i32 = arith.constant 0 : i32
    %c0_i32_0 = arith.constant 0 : i32
    %c0_i32_1 = arith.constant 0 : i32
    return %c0_i32, %c0_i32_0 : i32, i32
  }
  func.func @transform_5(%arg0: i32) -> (i32, i32) {
    %c0_i32 = arith.constant 0 : i32
    %c0_i32_0 = arith.constant 0 : i32
    return %arg0, %c0_i32 : i32, i32
  }
}

</mosaic_0001>

<llo_original>
// kernel: tpu_custom_call.1
$region0: #{tpu_custom_call.1}
  #allocation0 [shape = 'u32[]', space=smem, size = 0x4, offset = 0x4, fixed_abs, tag = 'smem constant byte address 0x4 - core index']
  #allocation1 [shape = 'u32[144,128]{1,0:T(1,128)}', space=vmem, size = 0x12000, scoped, tag = 'internal scratch']
  %s0 = inlined_call_operand.hbm [shape: f32[2,32], index: 0, kind: input, shape index: {}]
  %s1 = inlined_call_operand.hbm [shape: bf16[32,128], index: 1, kind: input, shape index: {}]
  %s2 = inlined_call_operand.vmem [shape: f32[1,128], index: 2, kind: input, shape index: {}]
  %s3 = inlined_call_operand.hbm [shape: bf16[128,128], index: 3, kind: input, shape index: {}]
  %s4 = inlined_call_operand.vmem [shape: f32[1,128], index: 4, kind: input, shape index: {}]
  %s5 = inlined_call_operand.hbm [shape: f32[2,128], index: 5, kind: output, shape index: {}]
  %s6 = sld [smem:[#allocation0]]
  $region42: #{tpu_custom_call.1} parent=0
    _
  %s8 = ssub.s32 1, %s6
  %s9 = scalar_select 0, %s8, %s6
  $region1: #{tpu_custom_call.1} parent=0
    #allocation2 [shape = 'u8[4096]{0}', space=vmem, size = 0x1000, scoped, tag = 'input window, operand 0, single buffered']
    #allocation3 [shape = 's32[1]{0}', space=sflag, size = 0x4, scoped, tag = 'scoped memory for tpu_custom_call.1']
    #allocation4 [shape = 's32[1]{0}', space=sflag, size = 0x4, scoped, tag = 'scoped memory for tpu_custom_call.1']
    #allocation5 [shape = 'u8[8192]{0}', space=vmem, size = 0x2000, scoped, tag = 'input window, operand 1, single buffered']
    #allocation6 [shape = 's32[1]{0}', space=sflag, size = 0x4, scoped, tag = 'scoped memory for tpu_custom_call.1']
    #allocation7 [shape = 'u8[32768]{0}', space=vmem, size = 0x8000, scoped, tag = 'input window, operand 3, single buffered']
    #allocation8 [shape = 'u8[4096]{0}', space=vmem, size = 0x1000, scoped, tag = 'output window, operand 0, single buffered']
    %10 = vsyncpa [#allocation3], 0
    %11 = vsyncpa [#allocation6], 0
    %12 = vsyncpa [#allocation4], 0
    // Predicated region
    $region2: #{tpu_custom_call.1} parent=1 // pred_check
      _
    $region3: #{tpu_custom_call.1} parent=1 // pred_check_branch
      %14 = sbr.rel (0) target = $region5
    $region4: #{tpu_custom_call.1} parent=1 // pred_region
      %s16 = ssub.s32 128, 32
      %17 = vsyncadd [#allocation3], %s16
      %s18 = sshll.u32 [#allocation2], 4
      %s19 = int_to_ptr.vmem [resolvable:$true] %s18
      %24 = dma.hbm_to_vmem [thread:$0]  %s0, 32, %s19, [#allocation3], 32, 32, 2
    $region5: #{tpu_custom_call.1} parent=1 // pred_fallthru
      _
    // Predicated region
    $region6: #{tpu_custom_call.1} parent=1 // pred_check
      _
    $region7: #{tpu_custom_call.1} parent=1 // pred_check_branch
      %26 = sbr.rel (0) target = $region9
    $region8: #{tpu_custom_call.1} parent=1 // pred_region
      %s28 = ssub.s32 256, 256
      %29 = vsyncadd [#allocation6], %s28
      %s30 = sshll.u32 [#allocation5], 4
      %s31 = int_to_ptr.vmem [resolvable:$true] %s30
      %36 = dma.hbm_to_vmem [thread:$0]  %s1, 256, %s31, [#allocation6], 64, 64, 4
    $region9: #{tpu_custom_call.1} parent=1 // pred_fallthru
      _
    // Predicated region
    $region10: #{tpu_custom_call.1} parent=1 // pred_check
      _
    $region11: #{tpu_custom_call.1} parent=1 // pred_check_branch
      %38 = sbr.rel (0) target = $region13
    $region12: #{tpu_custom_call.1} parent=1 // pred_region
      _
    $region13: #{tpu_custom_call.1} parent=1 // pred_fallthru
      _
    // Predicated region
    $region14: #{tpu_custom_call.1} parent=1 // pred_check
      _
    $region15: #{tpu_custom_call.1} parent=1 // pred_check_branch
      %40 = sbr.rel (0) target = $region17
    $region16: #{tpu_custom_call.1} parent=1 // pred_region
      %s42 = ssub.s32 1024, 1024
      %43 = vsyncadd [#allocation6], %s42
      %s44 = sshll.u32 [#allocation7], 4
      %s45 = int_to_ptr.vmem [resolvable:$true] %s44
      %50 = dma.hbm_to_vmem [thread:$0]  %s3, 1024, %s45, [#allocation6], 64, 64, 4
    $region17: #{tpu_custom_call.1} parent=1 // pred_fallthru
      _
    // Predicated region
    $region18: #{tpu_custom_call.1} parent=1 // pred_check
      _
    $region19: #{tpu_custom_call.1} parent=1 // pred_check_branch
      %52 = sbr.rel (0) target = $region21
    $region20: #{tpu_custom_call.1} parent=1 // pred_region
      _
    $region21: #{tpu_custom_call.1} parent=1 // pred_fallthru
      _
    // Predicated region
    $region22: #{tpu_custom_call.1} parent=1 // pred_check
      _
    $region23: #{tpu_custom_call.1} parent=1 // pred_check_branch
      %54 = sbr.rel (0) target = $region25
    $region24: #{tpu_custom_call.1} parent=1 // pred_region
      %55 = dma.done [#allocation3], 128
    $region25: #{tpu_custom_call.1} parent=1 // pred_fallthru
      _
    // Predicated region
    $region26: #{tpu_custom_call.1} parent=1 // pred_check
      _
    $region27: #{tpu_custom_call.1} parent=1 // pred_check_branch
      %57 = sbr.rel (0) target = $region29
    $region28: #{tpu_custom_call.1} parent=1 // pred_region
      %58 = dma.done [#allocation6], 256
    $region29: #{tpu_custom_call.1} parent=1 // pred_fallthru
      _
    // Predicated region
    $region30: #{tpu_custom_call.1} parent=1 // pred_check
      _
    $region31: #{tpu_custom_call.1} parent=1 // pred_check_branch
      %60 = sbr.rel (0) target = $region33
    $region32: #{tpu_custom_call.1} parent=1 // pred_region
      %61 = dma.done [#allocation6], 1024
    $region33: #{tpu_custom_call.1} parent=1 // pred_fallthru
      _
    %v63 = vld [vmem:[#allocation2] sm:$0xff]
    %v64 = vpack.c.bf16 %v63, %v63
    %v65 = vld [vmem:[#allocation5] sm:$0xf]
    %v66 = vld [vmem:[#allocation5 + $0x4] sm:$0xf]
    %v67 = vld [vmem:[#allocation5 + $0x8] sm:$0xf]
    %v68 = vld [vmem:[#allocation5 + $0xc] sm:$0xf]
    %v69 = vld [vmem:[%s2] sm:$0x1]
    %v71 = vlaneseq
    %v72 = vshrl.u32 %v71, 7
    %v73 = vsub.s32 0, %v72
    %v74 = vrot.slane %v69, %v73
    %v80 = vunpack.c.l.b16 %v65
    %v81 = vunpack.c.l.b16 %v66
    %v82 = vunpack.c.l.b16 %v67
    %v83 = vunpack.c.l.b16 %v68
    %v84 = vpack.c.b16 %v81, %v80
    %v85 = vpack.c.b16 %v83, %v82
    %vm88 = vcmask 261120
    %v90 = vsel %vm88, %v64, 0
    %92 = vmatprep.subr.bf16.mxu0 0
    %93 = vmatpush1.bf16.msra.mxu0 %v84
    %94 = vmatprep.subr.bf16.mxu0 0
    %95 = vmatpush1.bf16.msra.mxu0 %v85
    %96 = vmatprep.subr.bf16.mxu0 0
    %97 = vmatpush1.bf16.msra.mxu0 0
    %98 = vmatprep.subr.bf16.mxu0 0
    %99 = vmatpush1.bf16.msra.mxu0 0
    %100 = vmatprep.subr.bf16.mxu0 0
    %101 = vmatpush1.bf16.msra.mxu0 0
    %102 = vmatprep.subr.bf16.mxu0 0
    %103 = vmatpush1.bf16.msra.mxu0 0
    %104 = vmatprep.subr.bf16.mxu0 0
    %105 = vmatpush1.bf16.msra.mxu0 0
    %106 = vmatprep.subr.bf16.mxu0 0
    %107 = vmatpush1.bf16.msra.mxu0 0
    %108 = vmatprep.subr.bf16.mxu0 0
    %109 = vmatpush1.bf16.msra.mxu0 0
    %110 = vmatprep.subr.bf16.mxu0 0
    %111 = vmatpush1.bf16.msra.mxu0 0
    %112 = vmatprep.subr.bf16.mxu0 0
    %113 = vmatpush1.bf16.msra.mxu0 0
    %114 = vmatprep.subr.bf16.mxu0 0
    %115 = vmatpush1.bf16.msra.mxu0 0
    %116 = vmatprep.subr.bf16.mxu0 0
    %117 = vmatpush1.bf16.msra.mxu0 0
    %118 = vmatprep.subr.bf16.mxu0 0
    %119 = vmatpush1.bf16.msra.mxu0 0
    %120 = vmatprep.subr.bf16.mxu0 0
    %121 = vmatpush1.bf16.msra.mxu0 0
    %122 = vmatprep.subr.bf16.mxu0 0
    %123 = vmatpush1.bf16.msra.mxu0 0
    %124 = vmatprep.mubr.bf16.mxu0 0
    %125 = vmatmul.mubr.bf16.gmra.mrb[0].mxu0 %v90
    %v126 = vpop.f32.mrb[0].mxu0
    %v127 = vadd.f32 %v74, %v126
    %v128 = vpop.f32.mrb[0].mxu0
    %v129 = vpop.f32.mrb[0].mxu0
    %v130 = vpop.f32.mrb[0].mxu0
    %131 = vdwg.mxu0
    %v132 = vtanh.pop %v127
    %v133 = vpack.c.bf16 %v132, %v132
    %v134 = vld [vmem:[#allocation7] sm:$0xf]
    %v135 = vld [vmem:[#allocation7 + $0x4] sm:$0xf]
    %v136 = vld [vmem:[#allocation7 + $0x8] sm:$0xf]
    %v137 = vld [vmem:[#allocation7 + $0xc] sm:$0xf]
    %v138 = vld [vmem:[#allocation7 + $0x10] sm:$0xf]
    %v139 = vld [vmem:[#allocation7 + $0x14] sm:$0xf]
    %v140 = vld [vmem:[#allocation7 + $0x18] sm:$0xf]
    %v141 = vld [vmem:[#allocation7 + $0x1c] sm:$0xf]
    %v142 = vld [vmem:[#allocation7 + $0x20] sm:$0xf]
    %v143 = vld [vmem:[#allocation7 + $0x24] sm:$0xf]
    %v144 = vld [vmem:[#allocation7 + $0x28] sm:$0xf]
    %v145 = vld [vmem:[#allocation7 + $0x2c] sm:$0xf]
    %v146 = vld [vmem:[#allocation7 + $0x30] sm:$0xf]
    %v147 = vld [vmem:[#allocation7 + $0x34] sm:$0xf]
    %v148 = vld [vmem:[#allocation7 + $0x38] sm:$0xf]
    %v149 = vld [vmem:[#allocation7 + $0x3c] sm:$0xf]
    %v150 = vld [vmem:[%s4] sm:$0x1]
    %v152 = vlaneseq
    %v153 = vshrl.u32 %v152, 7
    %v154 = vsub.s32 0, %v153
    %v155 = vrot.slane %v150, %v154
    %v173 = vunpack.c.l.b16 %v134
    %v174 = vunpack.c.l.b16 %v135
    %v175 = vunpack.c.l.b16 %v136
    %v176 = vunpack.c.l.b16 %v137
    %v177 = vunpack.c.l.b16 %v138
    %v178 = vunpack.c.l.b16 %v139
    %v179 = vunpack.c.l.b16 %v140
    %v180 = vunpack.c.l.b16 %v141
    %v181 = vunpack.c.l.b16 %v142
    %v182 = vunpack.c.l.b16 %v143
    %v183 = vunpack.c.l.b16 %v144
    %v184 = vunpack.c.l.b16 %v145
    %v185 = vunpack.c.l.b16 %v146
    %v186 = vunpack.c.l.b16 %v147
    %v187 = vunpack.c.l.b16 %v148
    %v188 = vunpack.c.l.b16 %v149
    %v189 = vpack.c.b16 %v174, %v173
    %v190 = vpack.c.b16 %v176, %v175
    %v191 = vpack.c.b16 %v178, %v177
    %v192 = vpack.c.b16 %v180, %v179
    %v193 = vpack.c.b16 %v182, %v181
    %v194 = vpack.c.b16 %v184, %v183
    %v195 = vpack.c.b16 %v186, %v185
    %v196 = vpack.c.b16 %v188, %v187
    %205 = vmatprep.subr.bf16.mxu0 0
    %206 = vmatpush1.bf16.msra.mxu0 %v189
    %207 = vmatprep.subr.bf16.mxu0 0
    %208 = vmatpush1.bf16.msra.mxu0 %v190
    %209 = vmatprep.subr.bf16.mxu0 0
    %210 = vmatpush1.bf16.msra.mxu0 %v191
    %211 = vmatprep.subr.bf16.mxu0 0
    %212 = vmatpush1.bf16.msra.mxu0 %v192
    %213 = vmatprep.subr.bf16.mxu0 0
    %214 = vmatpush1.bf16.msra.mxu0 %v193
    %215 = vmatprep.subr.bf16.mxu0 0
    %216 = vmatpush1.bf16.msra.mxu0 %v194
    %217 = vmatprep.subr.bf16.mxu0 0
    %218 = vmatpush1.bf16.msra.mxu0 %v195
    %219 = vmatprep.subr.bf16.mxu0 0
    %220 = vmatpush1.bf16.msra.mxu0 %v196
    %221 = vmatprep.subr.bf16.mxu0 0
    %222 = vmatpush1.bf16.msra.mxu0 0
    %223 = vmatprep.subr.bf16.mxu0 0
    %224 = vmatpush1.bf16.msra.mxu0 0
    %225 = vmatprep.subr.bf16.mxu0 0
    %226 = vmatpush1.bf16.msra.mxu0 0
    %227 = vmatprep.subr.bf16.mxu0 0
    %228 = vmatpush1.bf16.msra.mxu0 0
    %229 = vmatprep.subr.bf16.mxu0 0
    %230 = vmatpush1.bf16.msra.mxu0 0
    %231 = vmatprep.subr.bf16.mxu0 0
    %232 = vmatpush1.bf16.msra.mxu0 0
    %233 = vmatprep.subr.bf16.mxu0 0
    %234 = vmatpush1.bf16.msra.mxu0 0
    %235 = vmatprep.subr.bf16.mxu0 0
    %236 = vmatpush1.bf16.msra.mxu0 0
    %237 = vmatprep.mubr.bf16.mxu0 0
    %238 = vmatmul.mubr.bf16.gmra.mrb[0].mxu0 %v133
    %v239 = vpop.f32.mrb[0].mxu0
    %v240 = vadd.f32 %v155, %v239
    %v241 = vpop.f32.mrb[0].mxu0
    %v242 = vpop.f32.mrb[0].mxu0
    %v243 = vpop.f32.mrb[0].mxu0
    %244 = vdwg.mxu0
    %245 = vst [vmem:[#allocation8] sm:$0xff] %v240
    // Predicated region
    $region34: #{tpu_custom_call.1} parent=1 // pred_check
      _
    $region35: #{tpu_custom_call.1} parent=1 // pred_check_branch
      %247 = sbr.rel (0) target = $region37
    $region36: #{tpu_custom_call.1} parent=1 // pred_region
      %s249 = ssub.s32 128, 32
      %250 = vsyncadd [#allocation4], %s249
      %s251 = sshll.u32 [#allocation8], 4
      %s252 = int_to_ptr.vmem [resolvable:$true] %s251
      %257 = dma.vmem_to_hbm [thread:$0]  %s252, 32, %s5, [#allocation4], 32, 32, 2
    $region37: #{tpu_custom_call.1} parent=1 // pred_fallthru
      _
    // Predicated region
    $region38: #{tpu_custom_call.1} parent=1 // pred_check
      _
    $region39: #{tpu_custom_call.1} parent=1 // pred_check_branch
      %259 = sbr.rel (0) target = $region41
    $region40: #{tpu_custom_call.1} parent=1 // pred_region
      %260 = dma.done [#allocation4], 128
    $region41: #{tpu_custom_call.1} parent=1 // pred_fallthru
      _
    %261 = vsyncpa [#allocation3], 1
    %262 = vsyncpa [#allocation6], 1
    %263 = vsyncpa [#allocation4], 1

</llo_original>
